<compile_context>
chip_gen: v7x
topology: tpu7x:2x2x1
jax: 0.10.0
libtpu: 0.0.40
codegen_flags: <defaults>
</compile_context>

<pallas_src>
import functools
import numpy as np
import jax
import jax.numpy as jnp
from jax import lax
from jax.experimental import pallas as pl
from jax.experimental.pallas import tpu as pltpu


# ----------------------------- tiled matmul --------------------------------

def _matmul_kernel(a_ref, b_ref, o_ref, acc_ref):
    @pl.when(pl.program_id(2) == 0)
    def _():
        acc_ref[...] = jnp.zeros_like(acc_ref)

    acc_ref[...] += jnp.dot(a_ref[...], b_ref[...],
                            preferred_element_type=jnp.float32)

    @pl.when(pl.program_id(2) == pl.num_programs(2) - 1)
    def _():
        o_ref[...] = acc_ref[...].astype(o_ref.dtype)


def _tile(dim, target):
    """Largest-of(target, dim) tile that divides dim (falls back to full dim)."""
    return target if (dim >= target and dim % target == 0) else dim


def pallas_matmul(a, b, *, tm=256, tn=256, tk=512):
    """(M,K) @ (K,N) -> (M,N), tiled with a resident f32 VMEM accumulator."""
    M, K = a.shape
    K2, N = b.shape
    assert K == K2
    tm, tn, tk = _tile(M, tm), _tile(N, tn), _tile(K, tk)
    grid = (M // tm, N // tn, K // tk)
    return pl.pallas_call(
        _matmul_kernel,
        grid=grid,
        in_specs=[
            pl.BlockSpec((tm, tk), lambda i, j, k: (i, k)),
            pl.BlockSpec((tk, tn), lambda i, j, k: (k, j)),
        ],
        out_specs=pl.BlockSpec((tm, tn), lambda i, j, k: (i, j)),
        out_shape=jax.ShapeDtypeStruct((M, N), jnp.float32),
        scratch_shapes=[pltpu.VMEM((tm, tn), jnp.float32)],
        compiler_params=pltpu.CompilerParams(
            dimension_semantics=("parallel", "parallel", "arbitrary")),
    )(a, b)


# ------------------------- splat-attention kernel ---------------------------

def _gsa_attn_kernel(q_ref, k_ref, v_ref, cmat_ref, hmask_ref, c2_ref,
                     niv_ref, ampt_ref, o_ref, *, n_heads, n_splats, head_dim):
    """One (batch, query-tile) step of Gaussian-splat attention, all heads.

    q_ref    : (tq, D)       queries (head-major packing of the D axis)
    k_ref    : (T,  D)       keys
    v_ref    : (T,  D)       values
    cmat_ref : (D, H*S)      block-diagonal packed splat centers
    hmask_ref: (D, H*S)      head-membership mask (1 where dim d belongs to head of column)
    c2_ref   : (1, H*S)      ||center||^2 per (head, splat)
    niv_ref  : (1, H*S)      -0.5 / (scale^2 + 1e-8)
    ampt_ref : (1, H*S)      amplitude / clamped temperature   (temp folded in)
    o_ref    : (tq, D)       output (lane-dense)
    """
    q = q_ref[...]
    k = k_ref[...]
    v = v_ref[...]
    cmat = cmat_ref[...]
    hmask = hmask_ref[...]
    c2 = c2_ref[...]
    niv = niv_ref[...]
    ampt = ampt_ref[...]

    # token . center for every (head, splat) at once: block-diag matmul (MXU).
    qc = jnp.dot(q, cmat, preferred_element_type=jnp.float32)        # (tq, HS)
    kc = jnp.dot(k, cmat, preferred_element_type=jnp.float32)        # (T,  HS)
    # per-head squared norms, replicated over the splat axis (MXU).
    q2 = jnp.dot(q * q, hmask, preferred_element_type=jnp.float32)   # (tq, HS)
    k2 = jnp.dot(k * k, hmask, preferred_element_type=jnp.float32)   # (T,  HS)

    # squared distances (clamped at 0 against cancellation) -> Gaussian weights.
    q_d = jnp.maximum(q2 - 2.0 * qc + c2, 0.0)
    k_d = jnp.maximum(k2 - 2.0 * kc + c2, 0.0)
    qw = jnp.exp(q_d * niv) * ampt                                   # amp/temp folded in
    kw = jnp.exp(k_d * niv)

    S, hd = n_splats, head_dim
    for h in range(n_heads):
        s0 = h * S
        d0 = h * hd
        # logits_h[i, j] = sum_s (amp/temp)[h,s] * qw[i, h,s] * kw[j, h,s]
        logits = lax.dot_general(
            qw[:, s0:s0 + S], kw[:, s0:s0 + S],
            (((1,), (1,)), ((), ())),
            preferred_element_type=jnp.float32)                      # (tq, T)
        m = jnp.max(logits, axis=-1, keepdims=True)
        e = jnp.exp(logits - m)
        denom = jnp.sum(e, axis=-1, keepdims=True)                   # (tq, 1)
        o_h = jnp.dot(e, v[:, d0:d0 + hd],
                      preferred_element_type=jnp.float32)            # (tq, hd)
        # normalize AFTER the PV matmul (T*hd muls + EUP vrcp, not T*T divides)
        o_h = o_h * pl.reciprocal(denom, approx=True)
        o_ref[:, d0:d0 + hd] = o_h.astype(o_ref.dtype)


def gsa_attention(q, k, v, cmat, hmask, c2, niv, ampt, *,
                  n_heads, n_splats, tq=256):
    """q,k,v: (B,T,D) head-major; packed splat params as documented above."""
    B, T, D = q.shape
    HS = cmat.shape[1]
    hd = D // n_heads
    tq = min(tq, T)
    if T % tq != 0:
        tq = T
    grid = (B, T // tq)

    kernel = functools.partial(_gsa_attn_kernel, n_heads=n_heads,
                               n_splats=n_splats, head_dim=hd)
    return pl.pallas_call(
        kernel,
        grid=grid,
        in_specs=[
            pl.BlockSpec((None, tq, D), lambda b, i: (b, i, 0)),   # q tile
            pl.BlockSpec((None, T, D), lambda b, i: (b, 0, 0)),    # full k
            pl.BlockSpec((None, T, D), lambda b, i: (b, 0, 0)),    # full v
            pl.BlockSpec((D, HS), lambda b, i: (0, 0)),            # packed centers
            pl.BlockSpec((D, HS), lambda b, i: (0, 0)),            # head mask
            pl.BlockSpec((1, HS), lambda b, i: (0, 0)),            # ||c||^2
            pl.BlockSpec((1, HS), lambda b, i: (0, 0)),            # -0.5/var
            pl.BlockSpec((1, HS), lambda b, i: (0, 0)),            # amp / temp
        ],
        out_specs=pl.BlockSpec((None, tq, D), lambda b, i: (b, i, 0)),
        out_shape=jax.ShapeDtypeStruct((B, T, D), jnp.float32),
        compiler_params=pltpu.CompilerParams(
            dimension_semantics=("parallel", "parallel")),
    )(q, k, v, cmat, hmask, c2, niv, ampt)


# --------------------------- module-level wrapper ---------------------------

def gsa_forward(x, params, n_heads, n_splats):
    """Pallas implementation of GSAMechanism.forward (attention_mask unused,
    matching the torch reference)."""
    B, T, D = x.shape
    H, S = n_heads, n_splats
    hd = D // H
    HS = H * S

    # Derived splat parameters (cheap one-time glue in JAX).
    sig_move = jax.nn.sigmoid(params["movement_scale"])
    centers = params["splat_centers"] + params["splat_deltas"] * sig_move * 0.2  # (H,S,hd)
    scales = jnp.clip(jnp.exp(params["splat_log_scales"]), 0.01, 2.0)            # (H,S)
    amps = jnp.clip(jnp.exp(params["splat_log_amplitudes"]), 1e-6, 10.0)         # (H,S)
    temp = jnp.clip(params["temperature"], 0.1, 10.0)

    niv = (-0.5 / (scales ** 2 + 1e-8)).reshape(1, HS).astype(jnp.float32)
    ampt = (amps / temp).reshape(1, HS).astype(jnp.float32)        # temperature folded in
    c2 = jnp.sum(centers * centers, axis=-1).reshape(1, HS).astype(jnp.float32)

    # Packed block-diagonal center matrix and head-membership mask (D, H*S).
    eye_h = jnp.eye(H, dtype=jnp.float32)
    c_t = jnp.transpose(centers, (0, 2, 1))                        # (H, hd, S)
    cmat = (c_t[:, :, None, :] * eye_h[:, None, :, None]).reshape(D, HS)
    hmask = jnp.repeat(jnp.repeat(eye_h, hd, axis=0), S, axis=1)   # (D, HS)

    # QKV projection (weights pre-transposed once, outside the forward).
    qkv = pallas_matmul(x.reshape(B * T, D), params["w_qkv_t"])    # (B*T, 3D)
    qkv = qkv.reshape(B, T, 3 * D)
    q = qkv[:, :, 0 * D:1 * D]                                     # (B, T, D) head-major
    k = qkv[:, :, 1 * D:2 * D]
    v = qkv[:, :, 2 * D:3 * D]

    # Splat-attention core (Pallas kernel); output already (B, T, D) head-major.
    out = gsa_attention(q, k, v, cmat, hmask, c2, niv, ampt,
                        n_heads=H, n_splats=S)

    # Output projection.
    y = pallas_matmul(out.reshape(B * T, D), params["w_out_t"]).reshape(B, T, D)
    return y


# ------------------------------ reference (JAX) -----------------------------

def gsa_reference(x, params, n_heads, n_splats):
    """Direct transcription of the PyTorch forward, for verification."""
    B, T, D = x.shape
    H, S = n_heads, n_splats
    hd = D // H
    qkv = (x.reshape(B * T, D) @ params["w_qkv_t"]).reshape(B, T, 3, H, hd)
    q, k, v = qkv[:, :, 0], qkv[:, :, 1], qkv[:, :, 2]             # (B,T,H,hd)
    centers = params["splat_centers"] + params["splat_deltas"] * jax.nn.sigmoid(
        params["movement_scale"]) * 0.2
    scales = jnp.clip(jnp.exp(params["splat_log_scales"]), 0.01, 2.0)
    amps = jnp.clip(jnp.exp(params["splat_log_amplitudes"]), 1e-6, 10.0)

    logits = jnp.zeros((B, T, T, H), jnp.float32)
    for h in range(H):
        q_d = jnp.sum((q[:, :, h][:, :, None, :] - centers[h][None, None]) ** 2, -1)
        k_d = jnp.sum((k[:, :, h][:, :, None, :] - centers[h][None, None]) ** 2, -1)
        qw = jnp.exp(-0.5 * q_d / (scales[h] ** 2 + 1e-8))
        kw = jnp.exp(-0.5 * k_d / (scales[h] ** 2 + 1e-8))
        logits = logits.at[:, :, :, h].set(jnp.einsum("bis,bjs,s->bij", qw, kw, amps[h]))
    temp = jnp.clip(params["temperature"], 0.1, 10.0)
    attn = jax.nn.softmax(logits / temp, axis=2)
    out = jnp.einsum("btjh,bjhd->bthd", attn, v).reshape(B, T, D)
    return (out.reshape(B * T, D) @ params["w_out_t"]).reshape(B, T, D)


# ----------------------------------- main -----------------------------------

if __name__ == "__main__":
    # Small config: dim=32, heads=4, head_dim=8, splats=4, batch=2, seq=8.
    DIM, H, S = 32, 4, 4
    HD = DIM // H
    B, T = 2, 8

    key = jax.random.PRNGKey(0)
    ks = jax.random.split(key, 8)

    lim_qkv = 0.5 * np.sqrt(6.0 / (DIM + 3 * DIM))   # xavier_uniform gain=0.5
    lim_out = 0.5 * np.sqrt(6.0 / (DIM + DIM))

    w_qkv = jax.random.uniform(ks[3], (3 * DIM, DIM), jnp.float32,
                               minval=-lim_qkv, maxval=lim_qkv)
    w_out = jax.random.uniform(ks[4], (DIM, DIM), jnp.float32,
                               minval=-lim_out, maxval=lim_out)

    params = {
        "splat_centers": jax.random.normal(ks[0], (H, S, HD), jnp.float32) * 0.2,
        "splat_deltas": jnp.zeros((H, S, HD), jnp.float32),
        "splat_log_scales": jax.random.normal(ks[1], (H, S), jnp.float32) * 0.2
                            + np.log(0.5).astype(np.float32),
        "splat_log_amplitudes": jax.random.normal(ks[2], (H, S), jnp.float32) * 0.1 - 0.5,
        "movement_scale": jnp.float32(0.08),
        "temperature": jnp.float32(1.0),
        # Weights stored pre-transposed (x @ W^T == x @ w_t), transpose done once here.
        "w_qkv_t": jnp.asarray(w_qkv.T),
        "w_out_t": jnp.asarray(w_out.T),
    }

    x = jax.random.normal(ks[5], (B, T, DIM), jnp.float32)

    y = gsa_forward(x, params, H, S)
    y = jax.block_until_ready(y)

    y_ref = gsa_reference(x, params, H, S)
    err = float(np.max(np.abs(np.asarray(y) - np.asarray(y_ref))))
    assert np.allclose(np.asarray(y), np.asarray(y_ref), rtol=3e-3, atol=3e-3), err

    print("KERNEL_OK")
</pallas_src>

<mosaic_0001>
module attributes {stable_mosaic.version = 11 : i64} {
  func.func @_matmul_kernel(%arg0: i32, %arg1: i32, %arg2: i32, %arg3: memref<16x32xf32, #tpu.memory_space<vmem>>, %arg4: memref<32x96xf32, #tpu.memory_space<vmem>>, %arg5: memref<16x96xf32, #tpu.memory_space<vmem>>, %arg6: memref<16x96xf32, #tpu.memory_space<vmem>>) attributes {dimension_semantics = [#tpu.dimension_semantics<parallel>, #tpu.dimension_semantics<parallel>, #tpu.dimension_semantics<arbitrary>], iteration_bounds = array<i64: 1, 1, 1>, scalar_prefetch = 0 : i64, scratch_operands = 1 : i64, tpu.core_type = #tpu.core_type<tc>, window_params = [{transform_indices = @transform_0, window_bounds = array<i64: 16, 32>}, {transform_indices = @transform_1, window_bounds = array<i64: 32, 96>}, {transform_indices = @transform_2, window_bounds = array<i64: 16, 96>}]} {
    %c0_i32 = arith.constant 0 : i32
    %0 = arith.cmpi eq, %arg2, %c0_i32 : i32
    %1 = arith.extui %0 : i1 to i32
    %c0_i32_0 = arith.constant 0 : i32
    %2 = arith.cmpi ne, %1, %c0_i32_0 : i32
    scf.if %2 {
      %cst_10 = arith.constant 0.000000e+00 : f32
      %12 = vector.broadcast %cst_10 : f32 to vector<16x96xf32>
      %c0_11 = arith.constant 0 : index
      %c0_12 = arith.constant 0 : index
      %13 = vector.load %arg6[%c0_11, %c0_12] : memref<16x96xf32, #tpu.memory_space<vmem>>, vector<16x96xf32>
      tpu.vector_store %arg6[%c0_11, %c0_12], %12 {strides = array<i32>} : memref<16x96xf32, #tpu.memory_space<vmem>>, vector<16x96xf32>,
    } else {
    }
    %c0 = arith.constant 0 : index
    %c0_1 = arith.constant 0 : index
    %3 = vector.load %arg6[%c0, %c0_1] : memref<16x96xf32, #tpu.memory_space<vmem>>, vector<16x96xf32>
    %c0_2 = arith.constant 0 : index
    %c0_3 = arith.constant 0 : index
    %4 = vector.load %arg3[%c0_2, %c0_3] : memref<16x32xf32, #tpu.memory_space<vmem>>, vector<16x32xf32>
    %c0_4 = arith.constant 0 : index
    %c0_5 = arith.constant 0 : index
    %5 = vector.load %arg4[%c0_4, %c0_5] : memref<32x96xf32, #tpu.memory_space<vmem>>, vector<32x96xf32>
    %cst = arith.constant dense<0.000000e+00> : vector<16x96xf32>
    %6 = tpu.matmul %4, %5, %cst {dimension_numbers = #tpu.dot_dimension_numbers<[1], [0], [0], [1], [0, 0, 1, 1], [], []>} : vector<16x32xf32>, vector<32x96xf32>, vector<16x96xf32> -> vector<16x96xf32>
    %7 = arith.addf %3, %6 : vector<16x96xf32>
    %c0_6 = arith.constant 0 : index
    %c0_7 = arith.constant 0 : index
    %8 = vector.load %arg6[%c0_6, %c0_7] : memref<16x96xf32, #tpu.memory_space<vmem>>, vector<16x96xf32>
    tpu.vector_store %arg6[%c0_6, %c0_7], %7 {strides = array<i32>} : memref<16x96xf32, #tpu.memory_space<vmem>>, vector<16x96xf32>,
    %c0_i32_8 = arith.constant 0 : i32
    %9 = arith.cmpi eq, %arg2, %c0_i32_8 : i32
    %10 = arith.extui %9 : i1 to i32
    %c0_i32_9 = arith.constant 0 : i32
    %11 = arith.cmpi ne, %10, %c0_i32_9 : i32
    scf.if %11 {
      %c0_10 = arith.constant 0 : index
      %c0_11 = arith.constant 0 : index
      %12 = vector.load %arg6[%c0_10, %c0_11] : memref<16x96xf32, #tpu.memory_space<vmem>>, vector<16x96xf32>
      %c0_12 = arith.constant 0 : index
      %c0_13 = arith.constant 0 : index
      %13 = vector.load %arg5[%c0_12, %c0_13] : memref<16x96xf32, #tpu.memory_space<vmem>>, vector<16x96xf32>
      tpu.vector_store %arg5[%c0_12, %c0_13], %12 {strides = array<i32>} : memref<16x96xf32, #tpu.memory_space<vmem>>, vector<16x96xf32>,
    } else {
    }
    return
  }
  func.func @transform_0(%arg0: i32, %arg1: i32, %arg2: i32) -> (i32, i32) {
    %c0_i32 = arith.constant 0 : i32
    return %arg0, %arg2 : i32, i32
  }
  func.func @transform_1(%arg0: i32, %arg1: i32, %arg2: i32) -> (i32, i32) {
    %c0_i32 = arith.constant 0 : i32
    return %arg2, %arg1 : i32, i32
  }
  func.func @transform_2(%arg0: i32, %arg1: i32, %arg2: i32) -> (i32, i32) {
    %c0_i32 = arith.constant 0 : i32
    return %arg0, %arg1 : i32, i32
  }
}

</mosaic_0001>

<llo_original>
// kernel: tpu_custom_call.1
$region0: #{tpu_custom_call.1}
  #allocation0 [shape = 'u32[]', space=smem, size = 0x4, offset = 0x4, fixed_abs, tag = 'smem constant byte address 0x4 - core index']
  #allocation1 [shape = 'u32[144,128]{1,0:T(1,128)}', space=vmem, size = 0x12000, scoped, tag = 'internal scratch']
  #allocation2 [shape = 'f32[16,96]{1,0:T(8,128)}', space=vmem, size = 0x2000, scoped, tag = 'scratch operand']
  %s0 = inlined_call_operand.hbm [shape: f32[16,32], index: 0, kind: input, shape index: {}]
  %s1 = inlined_call_operand.hbm [shape: f32[32,96], index: 1, kind: input, shape index: {}]
  %s2 = inlined_call_operand.hbm [shape: f32[16,96], index: 2, kind: output, shape index: {}]
  %s3 = sld [smem:[#allocation0]]
  $region34: #{tpu_custom_call.1} parent=0
    _
  %s5 = ssub.s32 1, %s3
  %s6 = scalar_select 0, %s5, %s3
  $region1: #{tpu_custom_call.1} parent=0
    #allocation3 [shape = 'u8[8192]{0}', space=vmem, size = 0x2000, scoped, tag = 'input window, operand 0, single buffered']
    #allocation4 [shape = 's32[1]{0}', space=sflag, size = 0x4, scoped, tag = 'scoped memory for tpu_custom_call.1']
    #allocation5 [shape = 's32[1]{0}', space=sflag, size = 0x4, scoped, tag = 'scoped memory for tpu_custom_call.1']
    #allocation6 [shape = 'u8[16384]{0}', space=vmem, size = 0x4000, scoped, tag = 'input window, operand 1, single buffered']
    #allocation7 [shape = 's32[1]{0}', space=sflag, size = 0x4, scoped, tag = 'scoped memory for tpu_custom_call.1']
    #allocation8 [shape = 'u8[8192]{0}', space=vmem, size = 0x2000, scoped, tag = 'output window, operand 0, single buffered']
    %7 = vsyncpa [#allocation4], 0
    %8 = vsyncpa [#allocation7], 0
    %9 = vsyncpa [#allocation5], 0
    // Predicated region
    $region2: #{tpu_custom_call.1} parent=1 // pred_check
      _
    $region3: #{tpu_custom_call.1} parent=1 // pred_check_branch
      %11 = sbr.rel (0) target = $region5
    $region4: #{tpu_custom_call.1} parent=1 // pred_region
      %s13 = ssub.s32 256, 256
      %14 = vsyncadd [#allocation4], %s13
      %s15 = sshll.u32 [#allocation3], 4
      %s16 = int_to_ptr.vmem [resolvable:$true] %s15
      %21 = dma.hbm_to_vmem [thread:$0]  %s0, 256, %s16, [#allocation4], 128, 128, 8
    $region5: #{tpu_custom_call.1} parent=1 // pred_fallthru
      _
    // Predicated region
    $region6: #{tpu_custom_call.1} parent=1 // pred_check
      _
    $region7: #{tpu_custom_call.1} parent=1 // pred_check_branch
      %23 = sbr.rel (0) target = $region9
    $region8: #{tpu_custom_call.1} parent=1 // pred_region
      %s25 = ssub.s32 512, 512
      %26 = vsyncadd [#allocation7], %s25
      %s27 = sshll.u32 [#allocation6], 4
      %s28 = int_to_ptr.vmem [resolvable:$true] %s27
      %33 = dma.hbm_to_vmem [thread:$0]  %s1, 512, %s28, [#allocation7], 128, 128, 8
    $region9: #{tpu_custom_call.1} parent=1 // pred_fallthru
      _
    // Predicated region
    $region10: #{tpu_custom_call.1} parent=1 // pred_check
      _
    $region11: #{tpu_custom_call.1} parent=1 // pred_check_branch
      %35 = sbr.rel (0) target = $region13
    $region12: #{tpu_custom_call.1} parent=1 // pred_region
      %36 = dma.done [#allocation4], 256
    $region13: #{tpu_custom_call.1} parent=1 // pred_fallthru
      _
    // Predicated region
    $region14: #{tpu_custom_call.1} parent=1 // pred_check
      _
    $region15: #{tpu_custom_call.1} parent=1 // pred_check_branch
      %38 = sbr.rel (0) target = $region17
    $region16: #{tpu_custom_call.1} parent=1 // pred_region
      %39 = dma.done [#allocation7], 512
    $region17: #{tpu_custom_call.1} parent=1 // pred_fallthru
      _
    %p40 = scmp.eq.s32.totalorder 0, 0
    // Predicated region
    $region18: #{tpu_custom_call.1} parent=1 // pred_check
      %p41 = pneg %p40
    $region19: #{tpu_custom_call.1} parent=1 // pred_check_branch
      %43 = sbr.rel (%p41) target = $region21
    $region20: #{tpu_custom_call.1} parent=1 // pred_region
      %vm44 = vcmask 785408
      %45 = vst.msk [vmem:[#allocation2] sm:$0xff] %vm44, 0.0
      %46 = vst.msk [vmem:[#allocation2 + $0x8] sm:$0xff] %vm44, 0.0
    $region21: #{tpu_custom_call.1} parent=1 // pred_fallthru
      _
    %v47 = vld [vmem:[#allocation2] sm:$0xff]
    %v48 = vld [vmem:[#allocation2 + $0x8] sm:$0xff]
    %v49 = vld [vmem:[#allocation3] sm:$0xff]
    %v50 = vld [vmem:[#allocation3 + $0x8] sm:$0xff]
    %v51 = vld [vmem:[#allocation6] sm:$0xff]
    %v52 = vld [vmem:[#allocation6 + $0x8] sm:$0xff]
    %v53 = vld [vmem:[#allocation6 + $0x10] sm:$0xff]
    %v54 = vld [vmem:[#allocation6 + $0x18] sm:$0xff]
    %vm55 = vcmask 261120
    %v57 = vsel %vm55, %v49, 0
    %v60 = vsel %vm55, %v50, 0
    %62 = vmatprep.subr.mxu0 0.0
    %63 = vmatpush1.msra.mxu0 %v51
    %64 = vmatprep.subr.mxu0 0.0
    %65 = vmatpush1.msra.mxu0 %v52
    %66 = vmatprep.subr.mxu0 0.0
    %67 = vmatpush1.msra.mxu0 %v53
    %68 = vmatprep.subr.mxu0 0.0
    %69 = vmatpush1.msra.mxu0 %v54
    %70 = vmatprep.subr.mxu0 0.0
    %71 = vmatpush1.msra.mxu0 0.0
    %72 = vmatprep.subr.mxu0 0.0
    %73 = vmatpush1.msra.mxu0 0.0
    %74 = vmatprep.subr.mxu0 0.0
    %75 = vmatpush1.msra.mxu0 0.0
    %76 = vmatprep.subr.mxu0 0.0
    %77 = vmatpush1.msra.mxu0 0.0
    %78 = vmatprep.subr.mxu0 0.0
    %79 = vmatpush1.msra.mxu0 0.0
    %80 = vmatprep.subr.mxu0 0.0
    %81 = vmatpush1.msra.mxu0 0.0
    %82 = vmatprep.subr.mxu0 0.0
    %83 = vmatpush1.msra.mxu0 0.0
    %84 = vmatprep.subr.mxu0 0.0
    %85 = vmatpush1.msra.mxu0 0.0
    %86 = vmatprep.subr.mxu0 0.0
    %87 = vmatpush1.msra.mxu0 0.0
    %88 = vmatprep.subr.mxu0 0.0
    %89 = vmatpush1.msra.mxu0 0.0
    %90 = vmatprep.subr.mxu0 0.0
    %91 = vmatpush1.msra.mxu0 0.0
    %92 = vmatprep.subr.mxu0 0.0
    %93 = vmatpush1.msra.mxu0 0.0
    %94 = vmatprep.subr.mxu0 0.0
    %95 = vmatpush1.msra.mxu0 0.0
    %96 = vmatprep.subr.mxu0 0.0
    %97 = vmatpush1.msra.mxu0 0.0
    %98 = vmatprep.subr.mxu0 0.0
    %99 = vmatpush1.msra.mxu0 0.0
    %100 = vmatprep.subr.mxu0 0.0
    %101 = vmatpush1.msra.mxu0 0.0
    %102 = vmatprep.subr.mxu0 0.0
    %103 = vmatpush1.msra.mxu0 0.0
    %104 = vmatprep.subr.mxu0 0.0
    %105 = vmatpush1.msra.mxu0 0.0
    %106 = vmatprep.subr.mxu0 0.0
    %107 = vmatpush1.msra.mxu0 0.0
    %108 = vmatprep.subr.mxu0 0.0
    %109 = vmatpush1.msra.mxu0 0.0
    %110 = vmatprep.subr.mxu0 0.0
    %111 = vmatpush1.msra.mxu0 0.0
    %112 = vmatprep.subr.mxu0 0.0
    %113 = vmatpush1.msra.mxu0 0.0
    %114 = vmatprep.subr.mxu0 0.0
    %115 = vmatpush1.msra.mxu0 0.0
    %116 = vmatprep.subr.mxu0 0.0
    %117 = vmatpush1.msra.mxu0 0.0
    %118 = vmatprep.subr.mxu0 0.0
    %119 = vmatpush1.msra.mxu0 0.0
    %120 = vmatprep.subr.mxu0 0.0
    %121 = vmatpush1.msra.mxu0 0.0
    %122 = vmatprep.subr.mxu0 0.0
    %123 = vmatpush1.msra.mxu0 0.0
    %124 = vmatprep.subr.mxu0 0.0
    %125 = vmatpush1.msra.mxu0 0.0
    %126 = vmatprep.mubr.f32.mxu0 0.0
    %127 = vmatmul.mubr.f32.gmra.mrb[0].mxu0 %v57
    %v128 = vpop.f32.mrb[0].mxu0
    %v129 = vadd.f32 0.0, %v128
    %v130 = vpop.f32.mrb[0].mxu0
    %131 = vmatprep.mubr.f32.mxu0 0.0
    %132 = vmatmul.mubr.f32.gmra.mrb[0].mxu0 %v60
    %v133 = vpop.f32.mrb[0].mxu0
    %v134 = vadd.f32 0.0, %v133
    %v135 = vpop.f32.mrb[0].mxu0
    %136 = vdwg.mxu0
    %v137 = vadd.f32 %v47, %v129
    %v138 = vadd.f32 %v48, %v134
    %vm139 = vcmask 785408
    %140 = vst.msk [vmem:[#allocation2] sm:$0xff] %vm139, %v137
    %141 = vst.msk [vmem:[#allocation2 + $0x8] sm:$0xff] %vm139, %v138
    // Predicated region
    $region22: #{tpu_custom_call.1} parent=1 // pred_check
      %p142 = pneg %p40
    $region23: #{tpu_custom_call.1} parent=1 // pred_check_branch
      %144 = sbr.rel (%p142) target = $region25
    $region24: #{tpu_custom_call.1} parent=1 // pred_region
      %v145 = vld [vmem:[#allocation2] sm:$0xff]
      %v146 = vld [vmem:[#allocation2 + $0x8] sm:$0xff]
      %147 = vst.msk [vmem:[#allocation8] sm:$0xff] %vm139, %v145
      %148 = vst.msk [vmem:[#allocation8 + $0x8] sm:$0xff] %vm139, %v146
    $region25: #{tpu_custom_call.1} parent=1 // pred_fallthru
      _
    // Predicated region
    $region26: #{tpu_custom_call.1} parent=1 // pred_check
      _
    $region27: #{tpu_custom_call.1} parent=1 // pred_check_branch
      %150 = sbr.rel (0) target = $region29
    $region28: #{tpu_custom_call.1} parent=1 // pred_region
      %s152 = ssub.s32 256, 256
      %153 = vsyncadd [#allocation5], %s152
      %s154 = sshll.u32 [#allocation8], 4
      %s155 = int_to_ptr.vmem [resolvable:$true] %s154
      %160 = dma.vmem_to_hbm [thread:$0]  %s155, 256, %s2, [#allocation5], 128, 128, 8
    $region29: #{tpu_custom_call.1} parent=1 // pred_fallthru
      _
    // Predicated region
    $region30: #{tpu_custom_call.1} parent=1 // pred_check
      _
    $region31: #{tpu_custom_call.1} parent=1 // pred_check_branch
      %162 = sbr.rel (0) target = $region33
    $region32: #{tpu_custom_call.1} parent=1 // pred_region
      %163 = dma.done [#allocation5], 256
    $region33: #{tpu_custom_call.1} parent=1 // pred_fallthru
      _
    %164 = vsyncpa [#allocation4], 1
    %165 = vsyncpa [#allocation7], 1
    %166 = vsyncpa [#allocation5], 1

</llo_original>
